<compile_context>
chip_gen: v6e
topology: v6e:2x2x1
jax: 0.10.0
libtpu: 0.0.40
codegen_flags: <defaults>
</compile_context>

<pallas_src>
import functools

import jax
import jax.numpy as jnp
from jax.experimental import pallas as pl
from jax.experimental.pallas import tpu as pltpu


def _round_up(x: int, m: int) -> int:
    return ((x + m - 1) // m) * m


def _vmem_capacity_bytes() -> int:
    """Per-core VMEM capacity; conservative 64 MiB fallback (v7x per-TC)."""
    try:
        return int(pltpu.get_tpu_info().vmem_capacity_bytes)
    except Exception:
        return 64 << 20


def _resident_mlp_kernel(*refs, num_layers: int, mxu_dtype):
    """Fused (relu ->) matmul -> bias stack; weights resident in VMEM.

    refs = (x_ref, w0, b0, w1, b1, ..., o_ref)
      x_ref : (tile_b, in_pad)        activation tile (mxu_dtype)
      wi    : (in_pad_i, out_pad_i)   weight, (in, out) layout, mxu_dtype
      bi    : (1, out_pad_i)          lane-dense f32 bias row
      o_ref : (tile_b, out_pad_last)
    """
    x_ref, o_ref = refs[0], refs[-1]
    wb = refs[1:-1]

    h = x_ref[...]
    for i in range(num_layers):
        w_ref, b_ref = wb[2 * i], wb[2 * i + 1]
        if i > 0:
            # ReLU stays in f32 on the VPU (dtype-typed zero avoids promotion).
            h = jnp.maximum(h, jnp.array(0.0, h.dtype))
            # TODO(synk): dropout_prob=0.0 so Dropout is identity; a nonzero
            # prob would need pltpu.prng_seed / pltpu.stateful_bernoulli here.
        acc = jnp.dot(h.astype(mxu_dtype), w_ref[...],
                      preferred_element_type=jnp.float32)
        h = acc + b_ref[...]                      # f32 accumulate + bias
    o_ref[...] = h.astype(o_ref.dtype)


def _streaming_mlp_kernel(*refs, num_layers: int, mxu_dtype, in_dims, out_dims):
    """Same math, but weights live in HBM (pl.ANY) and are streamed layer by
    layer through a 2-deep VMEM double buffer, overlapping layer i+1's weight
    DMA with layer i's matmul + ReLU.  Used when the batch grid has one step.

    refs = (x_ref, w0_hbm, b0, w1_hbm, b1, ..., o_ref, wbuf, sem)
      wbuf : (2, max_in_pad, max_out_pad) VMEM scratch (mxu_dtype)
      sem  : DMA semaphores, shape (2,)
    """
    x_ref = refs[0]
    o_ref = refs[-3]
    wbuf, sem = refs[-2], refs[-1]
    wb = refs[1:1 + 2 * num_layers]

    copies = [None, None]

    def fetch(layer, slot):
        ip, op = in_dims[layer], out_dims[layer]
        cp = pltpu.make_async_copy(wb[2 * layer],
                                   wbuf.at[slot, :ip, :op],
                                   sem.at[slot])
        cp.start()
        copies[slot] = cp

    fetch(0, 0)
    h = x_ref[...]
    for i in range(num_layers):
        slot = i & 1
        if i + 1 < num_layers:
            fetch(i + 1, 1 - slot)     # next layer's weight DMA overlaps compute
        copies[slot].wait()
        if i > 0:
            h = jnp.maximum(h, jnp.array(0.0, h.dtype))
            # TODO(synk): dropout identity (p=0.0); see resident kernel note.
        acc = jnp.dot(h.astype(mxu_dtype),
                      wbuf[slot, :in_dims[i], :out_dims[i]],
                      preferred_element_type=jnp.float32)
        h = acc + wb[2 * i + 1][...]
    o_ref[...] = h.astype(o_ref.dtype)


class LinearsPallas:
    """Mirror of the PyTorch Linears module (relu activation, dropout=0.0).

    mxu_dtype: dtype fed to the MXU and carried through HBM for activations.
      bf16 (default) halves HBM/VMEM traffic; pass jnp.float32 for a
      full-precision path.  Accumulation / bias add / ReLU are always f32.
    out_dtype: dtype of the returned array (f32 default; pass bf16 to halve
      writeback when the consumer accepts it).
    """

    def __init__(self, dimensions, key, activation='relu', dropout_prob=0.0,
                 bias=True, mxu_dtype=jnp.bfloat16, out_dtype=jnp.float32,
                 max_batch_tile=512):
        assert len(dimensions) > 1
        assert activation == 'relu', "only activation='relu' is implemented"
        assert dropout_prob == 0.0, (
            "dropout_prob > 0 is not supported (inference/identity only)")
        self.dimensions = list(dimensions)
        self.mxu_dtype = mxu_dtype
        self.out_dtype = out_dtype
        self.max_batch_tile = max_batch_tile

        # Reference (PyTorch-style) parameters: W is (out, in), b is (out,).
        self.weights, self.biases = [], []
        for i in range(len(dimensions) - 1):
            fan_in, fan_out = dimensions[i], dimensions[i + 1]
            key, wk, bk = jax.random.split(key, 3)
            bound = 1.0 / (fan_in ** 0.5)          # nn.Linear default init range
            w = jax.random.uniform(wk, (fan_out, fan_in), jnp.float32,
                                   -bound, bound)
            b = (jax.random.uniform(bk, (fan_out,), jnp.float32, -bound, bound)
                 if bias else jnp.zeros((fan_out,), jnp.float32))
            self.weights.append(w)
            self.biases.append(b)

        # Kernel-layout parameters, built ONCE: (in, out) transpose, 128-lane
        # zero padding, mxu_dtype weights, f32 (1, out) bias rows.
        self.padded_dims = [_round_up(d, 128) for d in dimensions]
        self.w_kernel, self.b_kernel = [], []
        for i, (w, b) in enumerate(zip(self.weights, self.biases)):
            in_p, out_p = self.padded_dims[i], self.padded_dims[i + 1]
            wp = jnp.zeros((in_p, out_p), mxu_dtype)
            wp = wp.at[:w.shape[1], :w.shape[0]].set(w.T.astype(mxu_dtype))
            bp = jnp.zeros((1, out_p), jnp.float32)
            bp = bp.at[0, :b.shape[0]].set(b)
            self.w_kernel.append(wp)
            self.b_kernel.append(bp)

    def __call__(self, x):
        batch, in_dim = x.shape
        assert in_dim == self.dimensions[0]
        num_layers = len(self.w_kernel)
        in_pad, out_pad = self.padded_dims[0], self.padded_dims[-1]
        out_dim = self.dimensions[-1]
        act_dt, out_dt = self.mxu_dtype, self.out_dtype
        act_b = jnp.finfo(act_dt).bits // 8
        out_b = jnp.finfo(out_dt).bits // 8
        max_in_pad = max(self.padded_dims[:-1])
        max_out_pad = max(self.padded_dims[1:])
        max_feat_pad = max(self.padded_dims)

        weight_bytes = sum(int(w.size) * w.dtype.itemsize for w in self.w_kernel)
        bias_bytes = sum(int(b.size) * b.dtype.itemsize for b in self.b_kernel)

        # ---- batch-tile selection (generation / VMEM aware) ---------------
        cap = _vmem_capacity_bytes()
        budget = int(0.6 * cap)                      # leave compiler headroom
        per_row = (2 * in_pad * act_b                # x double-buffer
                   + 2 * out_pad * out_b             # out double-buffer
                   + max_feat_pad * (4 + act_b))     # f32 h + bf16 MXU copy
        rows_cap = max(128, (budget - weight_bytes - bias_bytes)
                       // max(per_row, 1))
        hard_cap = max(128, (min(self.max_batch_tile, rows_cap) // 128) * 128)

        if batch < 256:
            # Single full-dim tile (legal for any batch, no batch padding);
            # weight DMA is hidden by the layer-streaming kernel below.
            b_tile = batch
        else:
            # Multiple-of-128 tile, >=2 grid steps (keeps both v7x TCs busy),
            # chosen to minimize batch padding (513 -> 640, not 1024).
            best = None
            for t in range(128, hard_cap + 1, 128):
                pad = _round_up(batch, t)
                if pad // t < 2:
                    continue
                key = (pad, -t)
                if best is None or key < best[0]:
                    best = (key, t)
            b_tile = best[1] if best is not None else hard_cap
        b_pad = _round_up(batch, b_tile)
        grid_steps = b_pad // b_tile

        stream_buf_bytes = 2 * max_in_pad * max_out_pad * act_b
        streaming = (grid_steps == 1 and num_layers >= 2
                     and stream_buf_bytes + per_row * b_tile <= budget)

        # ---- input staging: cast once to the MXU/HBM activation dtype; pad
        #      only when it is not a no-op ----------------------------------
        if b_pad != batch or in_pad != in_dim:
            xp = jnp.zeros((b_pad, in_pad), act_dt)
            xp = xp.at[:batch, :in_dim].set(x.astype(act_dt))
        else:
            xp = x.astype(act_dt)      # no-op if x is already act_dt

        in_specs = [pl.BlockSpec((b_tile, in_pad), lambda i: (i, 0))]
        operands = [xp]
        resident_one = pl.Buffered(1)  # constant-index operands: 1 VMEM buffer
        if streaming:
            for w, b in zip(self.w_kernel, self.b_kernel):
                in_specs.append(pl.BlockSpec(memory_space=pl.ANY))   # stay in HBM
                in_specs.append(pl.BlockSpec(b.shape, lambda i: (0, 0),
                                             pipeline_mode=resident_one))
                operands += [w, b]
            scratch = [pltpu.VMEM((2, max_in_pad, max_out_pad), act_dt),
                       pltpu.SemaphoreType.DMA((2,))]
            kernel = functools.partial(
                _streaming_mlp_kernel, num_layers=num_layers, mxu_dtype=act_dt,
                in_dims=tuple(self.padded_dims[:-1]),
                out_dims=tuple(self.padded_dims[1:]))
            w_vmem = stream_buf_bytes + bias_bytes
        else:
            for w, b in zip(self.w_kernel, self.b_kernel):
                in_specs.append(pl.BlockSpec(w.shape, lambda i: (0, 0),
                                             pipeline_mode=resident_one))
                in_specs.append(pl.BlockSpec(b.shape, lambda i: (0, 0),
                                             pipeline_mode=resident_one))
                operands += [w, b]
            scratch = []
            kernel = functools.partial(
                _resident_mlp_kernel, num_layers=num_layers, mxu_dtype=act_dt)
            w_vmem = weight_bytes + bias_bytes

        # ---- VMEM budget for the compiler (raised above the ~16-32 MiB
        #      scoped default so large tiles fit; clamped to 90% of capacity)
        needed = (2 * b_tile * in_pad * act_b + 2 * b_tile * out_pad * out_b
                  + w_vmem + b_tile * max_feat_pad * (4 + act_b))
        vmem_limit = int(min(0.9 * cap, max(2 * needed, 32 << 20)))

        flops = 2 * b_pad * sum(self.padded_dims[i] * self.padded_dims[i + 1]
                                for i in range(num_layers))
        bytes_accessed = (b_pad * in_pad * act_b + weight_bytes + bias_bytes
                          + b_pad * out_pad * out_b)

        out = pl.pallas_call(
            kernel,
            out_shape=jax.ShapeDtypeStruct((b_pad, out_pad), out_dt),
            grid_spec=pltpu.PrefetchScalarGridSpec(
                num_scalar_prefetch=0,
                grid=(grid_steps,),
                in_specs=in_specs,
                out_specs=pl.BlockSpec((b_tile, out_pad), lambda i: (i, 0)),
                scratch_shapes=scratch),
            compiler_params=pltpu.CompilerParams(
                dimension_semantics=("parallel",),   # shards across v7x TCs
                vmem_limit_bytes=vmem_limit),
            cost_estimate=pl.CostEstimate(
                flops=int(flops), transcendentals=0,
                bytes_accessed=int(bytes_accessed)),
        )(*operands)

        if b_pad != batch or out_pad != out_dim:
            out = out[:batch, :out_dim]
        return out


def _reference_f32(x, weights, biases):
    """Exact PyTorch-module semantics, full f32."""
    h = x
    for i, (w, b) in enumerate(zip(weights, biases)):
        if i > 0:
            h = jnp.maximum(h, 0.0)
        h = h @ w.T + b
    return h


def _reference_matched(x, weights, biases, mxu_dtype):
    """Same dtype path as the kernel (bf16 MXU inputs, f32 accumulation)."""
    h = x.astype(jnp.float32)
    for i, (w, b) in enumerate(zip(weights, biases)):
        if i > 0:
            h = jnp.maximum(h, jnp.array(0.0, h.dtype))
        h = jnp.dot(h.astype(mxu_dtype), w.T.astype(mxu_dtype),
                    preferred_element_type=jnp.float32) + b
    return h


if __name__ == "__main__":
    key = jax.random.PRNGKey(0)
    key, xk1, xk2, pk = jax.random.split(key, 4)

    dimensions = [32, 64, 16]     # hidden sizes for the stacked Linear layers
    model = LinearsPallas(dimensions, pk)

    # Small batch: exercises the 1-step grid / weight-streaming path.
    x_small = jax.random.normal(xk1, (8, dimensions[0]), jnp.float32)
    out_small = jax.block_until_ready(model(x_small))
    assert out_small.shape == (8, dimensions[-1]), out_small.shape

    # Larger batch: exercises the multi-step grid / resident-weight path
    # (Buffered(1) weights, 128-row tiles, "parallel" batch axis).
    x_big = jax.random.normal(xk2, (384, dimensions[0]), jnp.float32)
    out_big = jax.block_until_ready(model(x_big))
    assert out_big.shape == (384, dimensions[-1]), out_big.shape

    for x, out in ((x_small, out_small), (x_big, out_big)):
        # Tight check against a reference with the identical dtype path.
        ref_m = _reference_matched(x, model.weights, model.biases,
                                   model.mxu_dtype)
        assert jnp.allclose(out, ref_m, atol=5e-4, rtol=5e-4), (
            float(jnp.max(jnp.abs(out - ref_m))))
        # Looser check against pure-f32 module semantics (bf16 MXU rounding).
        ref_f = _reference_f32(x, model.weights, model.biases)
        assert jnp.allclose(out, ref_f, atol=3e-2, rtol=3e-2), (
            float(jnp.max(jnp.abs(out - ref_f))))

    print("KERNEL_OK")
</pallas_src>

<mosaic_0001>
module attributes {stable_mosaic.version = 11 : i64} {
  func.func @_streaming_mlp_kernel(%arg0: i32, %arg1: memref<8x128xbf16, #tpu.memory_space<vmem>>, %arg2: memref<128x128xbf16, #tpu.memory_space<any>>, %arg3: memref<1x128xf32, #tpu.memory_space<vmem>>, %arg4: memref<128x128xbf16, #tpu.memory_space<any>>, %arg5: memref<1x128xf32, #tpu.memory_space<vmem>>, %arg6: memref<8x128xf32, #tpu.memory_space<vmem>>, %arg7: memref<2x128x128xbf16, #tpu.memory_space<vmem>>, %arg8: memref<2x!tpu.dma_semaphore, #tpu.memory_space<semaphore_mem>>) attributes {dimension_semantics = [#tpu.dimension_semantics<parallel>], iteration_bounds = array<i64: 1>, scalar_prefetch = 0 : i64, scratch_operands = 2 : i64, tpu.core_type = #tpu.core_type<tc>, window_params = [{transform_indices = @transform_0, window_bounds = array<i64: 8, 128>}, {}, {pipeline_mode = #tpu.pipeline_mode<synchronous>, transform_indices = @transform_2, window_bounds = array<i64: 1, 128>}, {}, {pipeline_mode = #tpu.pipeline_mode<synchronous>, transform_indices = @transform_4, window_bounds = array<i64: 1, 128>}, {transform_indices = @transform_5, window_bounds = array<i64: 8, 128>}]} {
    %c0_i32 = arith.constant 0 : i32
    %c0_i32_0 = arith.constant 0 : i32
    %c0_i32_1 = arith.constant 0 : i32
    %c0_i32_2 = arith.constant 0 : i32
    %0 = tpu.memref_slice %arg7[%c0_i32, %c0_i32_1, %c0_i32_2] : memref<2x128x128xbf16, #tpu.memory_space<vmem>> -> memref<1x128x128xbf16, #tpu.memory_space<vmem>>
    %1 = tpu.memref_squeeze %0 : memref<1x128x128xbf16, #tpu.memory_space<vmem>> -> memref<128x128xbf16, #tpu.memory_space<vmem>>
    %2 = tpu.memref_slice %arg8[%c0_i32_0] : memref<2x!tpu.dma_semaphore, #tpu.memory_space<semaphore_mem>> -> memref<1x!tpu.dma_semaphore, #tpu.memory_space<semaphore_mem>>
    %3 = tpu.memref_squeeze %2 : memref<1x!tpu.dma_semaphore, #tpu.memory_space<semaphore_mem>> -> memref<!tpu.dma_semaphore, #tpu.memory_space<semaphore_mem>>
    tpu.enqueue_dma source(%arg2 : memref<128x128xbf16, #tpu.memory_space<any>>) target(%1 : memref<128x128xbf16, #tpu.memory_space<vmem>>) target_semaphore(%3 : memref<!tpu.dma_semaphore, #tpu.memory_space<semaphore_mem>>)
    %c0 = arith.constant 0 : index
    %c0_3 = arith.constant 0 : index
    %4 = vector.load %arg1[%c0, %c0_3] : memref<8x128xbf16, #tpu.memory_space<vmem>>, vector<8x128xbf16>
    %c1_i32 = arith.constant 1 : i32
    %c1_i32_4 = arith.constant 1 : i32
    %c0_i32_5 = arith.constant 0 : i32
    %c0_i32_6 = arith.constant 0 : i32
    %5 = tpu.memref_slice %arg7[%c1_i32, %c0_i32_5, %c0_i32_6] : memref<2x128x128xbf16, #tpu.memory_space<vmem>> -> memref<1x128x128xbf16, #tpu.memory_space<vmem>>
    %6 = tpu.memref_squeeze %5 : memref<1x128x128xbf16, #tpu.memory_space<vmem>> -> memref<128x128xbf16, #tpu.memory_space<vmem>>
    %7 = tpu.memref_slice %arg8[%c1_i32_4] : memref<2x!tpu.dma_semaphore, #tpu.memory_space<semaphore_mem>> -> memref<1x!tpu.dma_semaphore, #tpu.memory_space<semaphore_mem>>
    %8 = tpu.memref_squeeze %7 : memref<1x!tpu.dma_semaphore, #tpu.memory_space<semaphore_mem>> -> memref<!tpu.dma_semaphore, #tpu.memory_space<semaphore_mem>>
    tpu.enqueue_dma source(%arg4 : memref<128x128xbf16, #tpu.memory_space<any>>) target(%6 : memref<128x128xbf16, #tpu.memory_space<vmem>>) target_semaphore(%8 : memref<!tpu.dma_semaphore, #tpu.memory_space<semaphore_mem>>)
    %c0_i32_7 = arith.constant 0 : i32
    %c0_i32_8 = arith.constant 0 : i32
    %c0_i32_9 = arith.constant 0 : i32
    %c0_i32_10 = arith.constant 0 : i32
    %9 = tpu.memref_slice %arg7[%c0_i32_7, %c0_i32_9, %c0_i32_10] : memref<2x128x128xbf16, #tpu.memory_space<vmem>> -> memref<1x128x128xbf16, #tpu.memory_space<vmem>>
    %10 = tpu.memref_squeeze %9 : memref<1x128x128xbf16, #tpu.memory_space<vmem>> -> memref<128x128xbf16, #tpu.memory_space<vmem>>
    %11 = tpu.memref_slice %arg8[%c0_i32_8] : memref<2x!tpu.dma_semaphore, #tpu.memory_space<semaphore_mem>> -> memref<1x!tpu.dma_semaphore, #tpu.memory_space<semaphore_mem>>
    %12 = tpu.memref_squeeze %11 : memref<1x!tpu.dma_semaphore, #tpu.memory_space<semaphore_mem>> -> memref<!tpu.dma_semaphore, #tpu.memory_space<semaphore_mem>>
    tpu.wait_dma2 semaphore(%12 : memref<!tpu.dma_semaphore, #tpu.memory_space<semaphore_mem>>) src(%arg2 : memref<128x128xbf16, #tpu.memory_space<any>>) dst(%10 : memref<128x128xbf16, #tpu.memory_space<vmem>>)
    %c0_11 = arith.constant 0 : index
    %c0_12 = arith.constant 0 : index
    %c0_13 = arith.constant 0 : index
    %13 = vector.load %arg7[%c0_11, %c0_12, %c0_13] : memref<2x128x128xbf16, #tpu.memory_space<vmem>>, vector<1x128x128xbf16>
    %14 = vector.shape_cast %13 : vector<1x128x128xbf16> to vector<128x128xbf16>
    %cst = arith.constant dense<0.000000e+00> : vector<8x128xf32>
    %15 = tpu.matmul %4, %14, %cst {dimension_numbers = #tpu.dot_dimension_numbers<[1], [0], [0], [1], [0, 0, 1, 1], [], []>} : vector<8x128xbf16>, vector<128x128xbf16>, vector<8x128xf32> -> vector<8x128xf32>
    %c0_14 = arith.constant 0 : index
    %c0_15 = arith.constant 0 : index
    %16 = vector.load %arg3[%c0_14, %c0_15] : memref<1x128xf32, #tpu.memory_space<vmem>>, vector<1x128xf32>
    %17 = vector.broadcast %16 : vector<1x128xf32> to vector<8x128xf32>
    %18 = arith.addf %15, %17 : vector<8x128xf32>
    %c1_i32_16 = arith.constant 1 : i32
    %c1_i32_17 = arith.constant 1 : i32
    %c0_i32_18 = arith.constant 0 : i32
    %c0_i32_19 = arith.constant 0 : i32
    %19 = tpu.memref_slice %arg7[%c1_i32_16, %c0_i32_18, %c0_i32_19] : memref<2x128x128xbf16, #tpu.memory_space<vmem>> -> memref<1x128x128xbf16, #tpu.memory_space<vmem>>
    %20 = tpu.memref_squeeze %19 : memref<1x128x128xbf16, #tpu.memory_space<vmem>> -> memref<128x128xbf16, #tpu.memory_space<vmem>>
    %21 = tpu.memref_slice %arg8[%c1_i32_17] : memref<2x!tpu.dma_semaphore, #tpu.memory_space<semaphore_mem>> -> memref<1x!tpu.dma_semaphore, #tpu.memory_space<semaphore_mem>>
    %22 = tpu.memref_squeeze %21 : memref<1x!tpu.dma_semaphore, #tpu.memory_space<semaphore_mem>> -> memref<!tpu.dma_semaphore, #tpu.memory_space<semaphore_mem>>
    tpu.wait_dma2 semaphore(%22 : memref<!tpu.dma_semaphore, #tpu.memory_space<semaphore_mem>>) src(%arg4 : memref<128x128xbf16, #tpu.memory_space<any>>) dst(%20 : memref<128x128xbf16, #tpu.memory_space<vmem>>)
    %cst_20 = arith.constant 0.000000e+00 : f32
    %23 = vector.broadcast %cst_20 : f32 to vector<8x128xf32>
    %24 = arith.maximumf %18, %23 : vector<8x128xf32>
    %25 = arith.truncf %24 : vector<8x128xf32> to vector<8x128xbf16>
    %c1 = arith.constant 1 : index
    %c0_21 = arith.constant 0 : index
    %c0_22 = arith.constant 0 : index
    %26 = vector.load %arg7[%c1, %c0_21, %c0_22] : memref<2x128x128xbf16, #tpu.memory_space<vmem>>, vector<1x128x128xbf16>
    %27 = vector.shape_cast %26 : vector<1x128x128xbf16> to vector<128x128xbf16>
    %cst_23 = arith.constant dense<0.000000e+00> : vector<8x128xf32>
    %28 = tpu.matmul %25, %27, %cst_23 {dimension_numbers = #tpu.dot_dimension_numbers<[1], [0], [0], [1], [0, 0, 1, 1], [], []>} : vector<8x128xbf16>, vector<128x128xbf16>, vector<8x128xf32> -> vector<8x128xf32>
    %c0_24 = arith.constant 0 : index
    %c0_25 = arith.constant 0 : index
    %29 = vector.load %arg5[%c0_24, %c0_25] : memref<1x128xf32, #tpu.memory_space<vmem>>, vector<1x128xf32>
    %30 = vector.broadcast %29 : vector<1x128xf32> to vector<8x128xf32>
    %31 = arith.addf %28, %30 : vector<8x128xf32>
    %c0_26 = arith.constant 0 : index
    %c0_27 = arith.constant 0 : index
    %32 = vector.load %arg6[%c0_26, %c0_27] : memref<8x128xf32, #tpu.memory_space<vmem>>, vector<8x128xf32>
    tpu.vector_store %arg6[%c0_26, %c0_27], %31 {strides = array<i32>} : memref<8x128xf32, #tpu.memory_space<vmem>>, vector<8x128xf32>,
    return
  }
  func.func @transform_0(%arg0: i32) -> (i32, i32) {
    %c0_i32 = arith.constant 0 : i32
    %c0_i32_0 = arith.constant 0 : i32
    return %arg0, %c0_i32 : i32, i32
  }
  func.func @transform_2(%arg0: i32) -> (i32, i32) {
    %c0_i32 = arith.constant 0 : i32
    %c0_i32_0 = arith.constant 0 : i32
    %c0_i32_1 = arith.constant 0 : i32
    return %c0_i32, %c0_i32_0 : i32, i32
  }
  func.func @transform_4(%arg0: i32) -> (i32, i32) {
    %c0_i32 = arith.constant 0 : i32
    %c0_i32_0 = arith.constant 0 : i32
    %c0_i32_1 = arith.constant 0 : i32
    return %c0_i32, %c0_i32_0 : i32, i32
  }
  func.func @transform_5(%arg0: i32) -> (i32, i32) {
    %c0_i32 = arith.constant 0 : i32
    %c0_i32_0 = arith.constant 0 : i32
    return %arg0, %c0_i32 : i32, i32
  }
}

</mosaic_0001>

<llo_original>
// kernel: tpu_custom_call.1
$region0: #{tpu_custom_call.1}
  #allocation0 [shape = 'u32[]', space=smem, size = 0x4, offset = 0x4, fixed_abs, tag = 'smem constant byte address 0x4 - core index']
  #allocation1 [shape = 'u32[144,128]{1,0:T(1,128)}', space=vmem, size = 0x12000, scoped, tag = 'internal scratch']
  #allocation2 [shape = 'bf16[2,128,128]{2,1,0:T(8,128)(2,1)}', space=vmem, size = 0x10000, scoped, tag = 'scratch operand']
  #allocation3 [shape = 's32[2]{0}', space=sflag, size = 0x8, scoped, tag = 'scratch operand']
  #allocation8 [shape = 's32[]', space=sflag, size = 0x4, offset = 0, fixed_abs, tag = 'sflag constant byte address 0x0 - dummy sync flag']
  #allocation9 [shape = 's32[]', space=sflag, size = 0x4, offset = 0, fixed_abs, tag = 'sflag constant byte address 0x0 - dummy sync flag']
  #allocation10 [shape = 'u32[]', space=smem, size = 0x4, offset = 0x44, fixed_abs, tag = 'smem constant byte address 0x44 - assertion arg 0']
  #allocation11 [shape = 'u32[]', space=smem, size = 0x4, offset = 0x48, fixed_abs, tag = 'smem constant byte address 0x48 - assertion arg 1']
  #allocation12 [shape = 's32[]', space=sflag, size = 0x4, offset = 0, fixed_abs, tag = 'sflag constant byte address 0x0 - dummy sync flag']
  #allocation13 [shape = 's32[]', space=sflag, size = 0x4, offset = 0, fixed_abs, tag = 'sflag constant byte address 0x0 - dummy sync flag']
  %s0 = inlined_call_operand.hbm [shape: bf16[8,128], index: 0, kind: input, shape index: {}]
  %s1 = inlined_call_operand.hbm [shape: bf16[128,128], index: 1, kind: input, shape index: {}]
  %s2 = inlined_call_operand.vmem [shape: f32[1,128], index: 2, kind: input, shape index: {}]
  %s3 = inlined_call_operand.hbm [shape: bf16[128,128], index: 3, kind: input, shape index: {}]
  %s4 = inlined_call_operand.vmem [shape: f32[1,128], index: 4, kind: input, shape index: {}]
  %s5 = inlined_call_operand.hbm [shape: f32[8,128], index: 5, kind: output, shape index: {}]
  %s6 = sld [smem:[#allocation0]]
  $region34: #{tpu_custom_call.1} parent=0
    _
  %s8 = ssub.s32 1, %s6
  %s9 = scalar_select 0, %s8, %s6
  $region1: #{tpu_custom_call.1} parent=0
    #allocation4 [shape = 'u8[2048]{0}', space=vmem, size = 0x800, scoped, tag = 'input window, operand 0, single buffered']
    #allocation5 [shape = 's32[1]{0}', space=sflag, size = 0x4, scoped, tag = 'scoped memory for tpu_custom_call.1']
    #allocation6 [shape = 's32[1]{0}', space=sflag, size = 0x4, scoped, tag = 'scoped memory for tpu_custom_call.1']
    #allocation7 [shape = 'u8[4096]{0}', space=vmem, size = 0x1000, scoped, tag = 'output window, operand 0, single buffered']
    %10 = vsyncpa [#allocation5], 0
    %11 = vsyncpa [#allocation6], 0
    // Predicated region
    $region2: #{tpu_custom_call.1} parent=1 // pred_check
      _
    $region3: #{tpu_custom_call.1} parent=1 // pred_check_branch
      %13 = sbr.rel (0) target = $region5
    $region4: #{tpu_custom_call.1} parent=1 // pred_region
      %s15 = ssub.s32 64, 64
      %16 = vsyncadd [#allocation5], %s15
      %s18 = sshll.u32 [#allocation4], 4
      %s19 = int_to_ptr.vmem [resolvable:$true] %s18
      %21 = dma.hbm_to_vmem [thread:$0]  %s0, 64, %s19, [#allocation5]
    $region5: #{tpu_custom_call.1} parent=1 // pred_fallthru
      _
    // Predicated region
    $region6: #{tpu_custom_call.1} parent=1 // pred_check
      _
    $region7: #{tpu_custom_call.1} parent=1 // pred_check_branch
      %23 = sbr.rel (0) target = $region9
    $region8: #{tpu_custom_call.1} parent=1 // pred_region
      _
    $region9: #{tpu_custom_call.1} parent=1 // pred_fallthru
      _
    // Predicated region
    $region10: #{tpu_custom_call.1} parent=1 // pred_check
      _
    $region11: #{tpu_custom_call.1} parent=1 // pred_check_branch
      %25 = sbr.rel (0) target = $region13
    $region12: #{tpu_custom_call.1} parent=1 // pred_region
      _
    $region13: #{tpu_custom_call.1} parent=1 // pred_fallthru
      _
    // Predicated region
    $region14: #{tpu_custom_call.1} parent=1 // pred_check
      _
    $region15: #{tpu_custom_call.1} parent=1 // pred_check_branch
      %27 = sbr.rel (0) target = $region17
    $region16: #{tpu_custom_call.1} parent=1 // pred_region
      %28 = dma.done [#allocation5], 64
    $region17: #{tpu_custom_call.1} parent=1 // pred_fallthru
      _
    // Predicated region
    $region18: #{tpu_custom_call.1} parent=1 // pred_check
      _
    $region19: #{tpu_custom_call.1} parent=1 // pred_check_branch
      %31 = sbr.rel target = $region21
    $region20: #{tpu_custom_call.1} parent=1 // pred_region
      %32 = sst [smem:[#allocation10]] [#allocation9]
      %33 = sst [smem:[#allocation11]] [#allocation8]
    $region21: #{tpu_custom_call.1} parent=1 // pred_fallthru
      _
    %35 = shalt.err (0)
    %s37 = sshll.u32 [#allocation2], 4
    %s38 = int_to_ptr.vmem [resolvable:$true] %s37
    %40 = dma.hbm_to_vmem [thread:$0]  %s1, 1024, %s38, [#allocation3]
    %v41 = vld [vmem:[#allocation4] sm:$0xf]
    %s42 = scalar_lea.vmem [#allocation2], 64
    %s43 = scalar_lea.sflag [#allocation3], 1
    // Predicated region
    $region22: #{tpu_custom_call.1} parent=1 // pred_check
      _
    $region23: #{tpu_custom_call.1} parent=1 // pred_check_branch
      %45 = sbr.rel target = $region25
    $region24: #{tpu_custom_call.1} parent=1 // pred_region
      %46 = sst [smem:[#allocation10]] [#allocation13]
      %47 = sst [smem:[#allocation11]] [#allocation12]
    $region25: #{tpu_custom_call.1} parent=1 // pred_fallthru
      _
    %49 = shalt.err (0)
    %s51 = sshll.u32 %s42, 4
    %s52 = int_to_ptr.vmem [resolvable:$true] %s51
    %54 = dma.hbm_to_vmem [thread:$0]  %s3, 1024, %s52, %s43
    %s55 = smul.u32 4, 16
    %s56 = smul.u32 %s55, 1
    %s57 = sshll.u32 %s56, 4
    %58 = dma.done [#allocation3], %s57
    %v59 = vld [vmem:[#allocation2] sm:$0xf]
    %v60 = vld [vmem:[#allocation2 + $0x4] sm:$0xf]
    %v61 = vld [vmem:[#allocation2 + $0x8] sm:$0xf]
    %v62 = vld [vmem:[#allocation2 + $0xc] sm:$0xf]
    %v63 = vld [vmem:[#allocation2 + $0x10] sm:$0xf]
    %v64 = vld [vmem:[#allocation2 + $0x14] sm:$0xf]
    %v65 = vld [vmem:[#allocation2 + $0x18] sm:$0xf]
    %v66 = vld [vmem:[#allocation2 + $0x1c] sm:$0xf]
    %v67 = vld [vmem:[#allocation2 + $0x20] sm:$0xf]
    %v68 = vld [vmem:[#allocation2 + $0x24] sm:$0xf]
    %v69 = vld [vmem:[#allocation2 + $0x28] sm:$0xf]
    %v70 = vld [vmem:[#allocation2 + $0x2c] sm:$0xf]
    %v71 = vld [vmem:[#allocation2 + $0x30] sm:$0xf]
    %v72 = vld [vmem:[#allocation2 + $0x34] sm:$0xf]
    %v73 = vld [vmem:[#allocation2 + $0x38] sm:$0xf]
    %v74 = vld [vmem:[#allocation2 + $0x3c] sm:$0xf]
    %v75 = vld [vmem:[%s2] sm:$0x1]
    %v77 = vlaneseq
    %v78 = vshrl.u32 %v77, 7
    %v79 = vsub.s32 0, %v78
    %v80 = vrot.slane %v75, %v79
    %v98 = vunpack.c.l.b16 %v59
    %v99 = vunpack.c.l.b16 %v60
    %v100 = vunpack.c.l.b16 %v61
    %v101 = vunpack.c.l.b16 %v62
    %v102 = vunpack.c.l.b16 %v63
    %v103 = vunpack.c.l.b16 %v64
    %v104 = vunpack.c.l.b16 %v65
    %v105 = vunpack.c.l.b16 %v66
    %v106 = vunpack.c.l.b16 %v67
    %v107 = vunpack.c.l.b16 %v68
    %v108 = vunpack.c.l.b16 %v69
    %v109 = vunpack.c.l.b16 %v70
    %v110 = vunpack.c.l.b16 %v71
    %v111 = vunpack.c.l.b16 %v72
    %v112 = vunpack.c.l.b16 %v73
    %v113 = vunpack.c.l.b16 %v74
    %v114 = vpack.c.b16 %v99, %v98
    %v115 = vpack.c.b16 %v101, %v100
    %v116 = vpack.c.b16 %v103, %v102
    %v117 = vpack.c.b16 %v105, %v104
    %v118 = vpack.c.b16 %v107, %v106
    %v119 = vpack.c.b16 %v109, %v108
    %v120 = vpack.c.b16 %v111, %v110
    %v121 = vpack.c.b16 %v113, %v112
    %130 = vmatprep.subr.bf16.mxu0 0
    %131 = vmatpush1.bf16.msra.mxu0 %v121
    %132 = vmatprep.subr.bf16.mxu0 0
    %133 = vmatpush1.bf16.msra.mxu0 %v120
    %134 = vmatprep.subr.bf16.mxu0 0
    %135 = vmatpush1.bf16.msra.mxu0 %v119
    %136 = vmatprep.subr.bf16.mxu0 0
    %137 = vmatpush1.bf16.msra.mxu0 %v118
    %138 = vmatprep.subr.bf16.mxu0 0
    %139 = vmatpush1.bf16.msra.mxu0 %v117
    %140 = vmatprep.subr.bf16.mxu0 0
    %141 = vmatpush1.bf16.msra.mxu0 %v116
    %142 = vmatprep.subr.bf16.mxu0 0
    %143 = vmatpush1.bf16.msra.mxu0 %v115
    %144 = vmatprep.subr.bf16.mxu0 0
    %145 = vmatpush1.bf16.msra.mxu0 %v114
    %146 = vmatprep.subr.bf16.mxu0 0
    %147 = vmatpush2.bf16.msra.mxu0 0
    %148 = vmatprep.subr.bf16.mxu0 0
    %149 = vmatpush2.bf16.msra.mxu0 0
    %150 = vmatprep.subr.bf16.mxu0 0
    %151 = vmatpush2.bf16.msra.mxu0 0
    %152 = vmatprep.subr.bf16.mxu0 0
    %153 = vmatpush2.bf16.msra.mxu0 0
    %154 = vmatprep.subr.bf16.mxu0 0
    %155 = vmatpush2.bf16.msra.mxu0 0
    %156 = vmatprep.subr.bf16.mxu0 0
    %157 = vmatpush2.bf16.msra.mxu0 0
    %158 = vmatprep.subr.bf16.mxu0 0
    %159 = vmatpush2.bf16.msra.mxu0 0
    %160 = vmatprep.subr.bf16.mxu0 0
    %161 = vmatpush2.bf16.msra.mxu0 0
    %162 = vmatprep.mubr.bf16.mxu0 0
    %163 = vmatmul.mubr.bf16.gmra.mxu0 %v41
    %v164 = vpop.f32.mrf.mxu0
    %v165 = vadd.f32 %v80, %v164
    %v166 = vpop.f32.mrf.mxu0
    %v167 = vpop.f32.mrf.mxu0
    %v168 = vpop.f32.mrf.mxu0
    %169 = vdwg.mxu0
    %s170 = sshll.u32 %s56, 4
    %171 = dma.done %s43, %s170
    %v172 = vmax.f32 %v165, 0.0
    %v173 = vpack.c.bf16 %v172, %v172
    %v174 = vld [vmem:[%s42] sm:$0xf]
    %v175 = vld [vmem:[%s42 + $0x4] sm:$0xf]
    %v176 = vld [vmem:[%s42 + $0x8] sm:$0xf]
    %v177 = vld [vmem:[%s42 + $0xc] sm:$0xf]
    %v178 = vld [vmem:[%s42 + $0x10] sm:$0xf]
    %v179 = vld [vmem:[%s42 + $0x14] sm:$0xf]
    %v180 = vld [vmem:[%s42 + $0x18] sm:$0xf]
    %v181 = vld [vmem:[%s42 + $0x1c] sm:$0xf]
    %v182 = vld [vmem:[%s42 + $0x20] sm:$0xf]
    %v183 = vld [vmem:[%s42 + $0x24] sm:$0xf]
    %v184 = vld [vmem:[%s42 + $0x28] sm:$0xf]
    %v185 = vld [vmem:[%s42 + $0x2c] sm:$0xf]
    %v186 = vld [vmem:[%s42 + $0x30] sm:$0xf]
    %v187 = vld [vmem:[%s42 + $0x34] sm:$0xf]
    %v188 = vld [vmem:[%s42 + $0x38] sm:$0xf]
    %v189 = vld [vmem:[%s42 + $0x3c] sm:$0xf]
    %v190 = vld [vmem:[%s4] sm:$0x1]
    %v192 = vlaneseq
    %v193 = vshrl.u32 %v192, 7
    %v194 = vsub.s32 0, %v193
    %v195 = vrot.slane %v190, %v194
    %v213 = vunpack.c.l.b16 %v174
    %v214 = vunpack.c.l.b16 %v175
    %v215 = vunpack.c.l.b16 %v176
    %v216 = vunpack.c.l.b16 %v177
    %v217 = vunpack.c.l.b16 %v178
    %v218 = vunpack.c.l.b16 %v179
    %v219 = vunpack.c.l.b16 %v180
    %v220 = vunpack.c.l.b16 %v181
    %v221 = vunpack.c.l.b16 %v182
    %v222 = vunpack.c.l.b16 %v183
    %v223 = vunpack.c.l.b16 %v184
    %v224 = vunpack.c.l.b16 %v185
    %v225 = vunpack.c.l.b16 %v186
    %v226 = vunpack.c.l.b16 %v187
    %v227 = vunpack.c.l.b16 %v188
    %v228 = vunpack.c.l.b16 %v189
    %v229 = vpack.c.b16 %v214, %v213
    %v230 = vpack.c.b16 %v216, %v215
    %v231 = vpack.c.b16 %v218, %v217
    %v232 = vpack.c.b16 %v220, %v219
    %v233 = vpack.c.b16 %v222, %v221
    %v234 = vpack.c.b16 %v224, %v223
    %v235 = vpack.c.b16 %v226, %v225
    %v236 = vpack.c.b16 %v228, %v227
    %245 = vmatprep.subr.bf16.mxu0 0
    %246 = vmatpush1.bf16.msra.mxu0 %v236
    %247 = vmatprep.subr.bf16.mxu0 0
    %248 = vmatpush1.bf16.msra.mxu0 %v235
    %249 = vmatprep.subr.bf16.mxu0 0
    %250 = vmatpush1.bf16.msra.mxu0 %v234
    %251 = vmatprep.subr.bf16.mxu0 0
    %252 = vmatpush1.bf16.msra.mxu0 %v233
    %253 = vmatprep.subr.bf16.mxu0 0
    %254 = vmatpush1.bf16.msra.mxu0 %v232
    %255 = vmatprep.subr.bf16.mxu0 0
    %256 = vmatpush1.bf16.msra.mxu0 %v231
    %257 = vmatprep.subr.bf16.mxu0 0
    %258 = vmatpush1.bf16.msra.mxu0 %v230
    %259 = vmatprep.subr.bf16.mxu0 0
    %260 = vmatpush1.bf16.msra.mxu0 %v229
    %261 = vmatprep.subr.bf16.mxu0 0
    %262 = vmatpush2.bf16.msra.mxu0 0
    %263 = vmatprep.subr.bf16.mxu0 0
    %264 = vmatpush2.bf16.msra.mxu0 0
    %265 = vmatprep.subr.bf16.mxu0 0
    %266 = vmatpush2.bf16.msra.mxu0 0
    %267 = vmatprep.subr.bf16.mxu0 0
    %268 = vmatpush2.bf16.msra.mxu0 0
    %269 = vmatprep.subr.bf16.mxu0 0
    %270 = vmatpush2.bf16.msra.mxu0 0
    %271 = vmatprep.subr.bf16.mxu0 0
    %272 = vmatpush2.bf16.msra.mxu0 0
    %273 = vmatprep.subr.bf16.mxu0 0
    %274 = vmatpush2.bf16.msra.mxu0 0
    %275 = vmatprep.subr.bf16.mxu0 0
    %276 = vmatpush2.bf16.msra.mxu0 0
    %277 = vmatprep.mubr.bf16.mxu0 0
    %278 = vmatmul.mubr.bf16.gmra.mxu0 %v173
    %v279 = vpop.f32.mrf.mxu0
    %v280 = vadd.f32 %v195, %v279
    %v281 = vpop.f32.mrf.mxu0
    %v282 = vpop.f32.mrf.mxu0
    %v283 = vpop.f32.mrf.mxu0
    %284 = vdwg.mxu0
    %285 = vst [vmem:[#allocation7] sm:$0xff] %v280
    // Predicated region
    $region26: #{tpu_custom_call.1} parent=1 // pred_check
      _
    $region27: #{tpu_custom_call.1} parent=1 // pred_check_branch
      %287 = sbr.rel (0) target = $region29
    $region28: #{tpu_custom_call.1} parent=1 // pred_region
      %s289 = ssub.s32 128, 128
      %290 = vsyncadd [#allocation6], %s289
      %s292 = sshll.u32 [#allocation7], 4
      %s293 = int_to_ptr.vmem [resolvable:$true] %s292
      %295 = dma.vmem_to_hbm [thread:$0]  %s293, 128, %s5, [#allocation6]
    $region29: #{tpu_custom_call.1} parent=1 // pred_fallthru
      _
    // Predicated region
    $region30: #{tpu_custom_call.1} parent=1 // pred_check
      _
    $region31: #{tpu_custom_call.1} parent=1 // pred_check_branch
      %297 = sbr.rel (0) target = $region33
    $region32: #{tpu_custom_call.1} parent=1 // pred_region
      %298 = dma.done [#allocation6], 128
    $region33: #{tpu_custom_call.1} parent=1 // pred_fallthru
      _
    %299 = vsyncpa [#allocation5], 1
    %300 = vsyncpa [#allocation6], 1
  %301 = vsyncmov [#allocation3]
  %s302 = vpop.sfrf %301
  %p303 = scmp.eq.s32.totalorder %s302, 0
  %p304 = pneg %p303
  %306 = shalt.err (%p304)
  %s307 = scalar_lea.sflag [#allocation3], 1
  %308 = vsyncmov %s307
  %s309 = vpop.sfrf %308
  %p310 = scmp.eq.s32.totalorder %s309, 0
  %p311 = pneg %p310
  %313 = shalt.err (%p311)

</llo_original>
